<compile_context>
chip_gen: v5e
topology: v5e:2x2
jax: 0.10.0
libtpu: 0.0.40
codegen_flags: <defaults>
</compile_context>

<pallas_src>
import numpy as np
import jax
import jax.numpy as jnp
from jax.experimental import pallas as pl
from jax.experimental.pallas import tpu as pltpu

GIN_EPS = 0.0     # GINConv default eps (train_eps=False)
BN_EPS = 1e-5     # torch.nn.BatchNorm1d default eps
LANE = 128
FLAG_FIRST = 1    # first nonzero block of a row tile -> init accumulator
FLAG_LAST = 2     # last nonzero block of a row tile  -> run epilogue / store


def _round_up(x, m):
    return ((x + m - 1) // m) * m


def _choose_tiles(n):
    """Pick (n_pad, tm, tk).  bf16 sublane tiling is 16 -> pad small graphs to
    a multiple of 16.  Large graphs: tm=512 / tk=1024 (A tile = 1 MiB bf16,
    double-buffered, well inside the 48 MiB scoped-VMEM budget) and n_pad//tm
    >= 2 so the row axis has work for both v7x TensorCores."""
    if n <= 512:
        n_pad = max(_round_up(n, 16), 16)
        # TODO(synk): single row tile leaves one v7x TensorCore idle on this
        #             small-graph path; fuse all layers into one pallas_call.
        return n_pad, n_pad, n_pad          # single tile each way
    tm, tk = 512, 1024
    return _round_up(n, tk), tm, tk         # tm divides tk -> both divide n_pad


def _block_schedule(src, dst, n_pad, tm, tk):
    """Flattened schedule over the NONZERO (row_tile, col_tile) blocks of A.
    Because the GIN self term is folded into A's diagonal, every row tile has
    at least one nonzero block, so every output tile gets written."""
    n_row, n_col = n_pad // tm, n_pad // tk
    nz = np.zeros((n_row, n_col), dtype=bool)
    if src.size:
        nz[dst // tm, src // tk] = True
    r = np.arange(n_row)
    nz[r, (r * tm) // tk] = True            # diagonal block (self term)
    rows, cols, flags = [], [], []
    for rt in range(n_row):
        cts = np.nonzero(nz[rt])[0]
        for j, ct in enumerate(cts):
            f = (FLAG_FIRST if j == 0 else 0) | \
                (FLAG_LAST if j == len(cts) - 1 else 0)
            rows.append(rt)
            cols.append(int(ct))
            flags.append(f)
    return (jnp.asarray(rows, jnp.int32), jnp.asarray(cols, jnp.int32),
            jnp.asarray(flags, jnp.int32), len(rows))


# ---------------------------------------------------------------------------
# Pallas kernels
# ---------------------------------------------------------------------------
def _gin_accumulate(flags_ref, a_ref, xk_ref, acc_ref):
    s = pl.program_id(0)

    @pl.when((flags_ref[s] & FLAG_FIRST) != 0)
    def _init():
        acc_ref[...] = jnp.zeros_like(acc_ref)

    # bf16 x bf16 MXU matmul, f32 accumulation (self term is on A's diagonal).
    acc_ref[...] += jnp.dot(a_ref[...], xk_ref[...],
                            preferred_element_type=jnp.float32)


def _mlp_prelu(h, w1_ref, b1_ref, w2_ref, b2_ref, alpha):
    # bf16 operands for single-pass MXU, f32 accumulation + f32 bias/PReLU.
    z1 = jnp.dot(h.astype(jnp.bfloat16), w1_ref[...],
                 preferred_element_type=jnp.float32) + b1_ref[...]
    z1 = jnp.maximum(z1, 0.0)
    z2 = jnp.dot(z1.astype(jnp.bfloat16), w2_ref[...],
                 preferred_element_type=jnp.float32) + b2_ref[...]
    return jnp.where(z2 > 0, z2, alpha * z2)


def gin_layer_kernel(row_sched_ref, col_sched_ref, flags_ref,   # scalar prefetch
                     a_ref, xk_ref,
                     w1_ref, b1_ref, w2_ref, b2_ref,
                     alpha_ref,                                 # SMEM (1,)
                     o_ref,
                     acc_ref):
    del row_sched_ref, col_sched_ref
    _gin_accumulate(flags_ref, a_ref, xk_ref, acc_ref)

    @pl.when((flags_ref[pl.program_id(0)] & FLAG_LAST) != 0)
    def _epilogue():
        o_ref[...] = _mlp_prelu(acc_ref[...], w1_ref, b1_ref, w2_ref, b2_ref,
                                alpha_ref[0]).astype(o_ref.dtype)


def gin_last_layer_kernel(row_sched_ref, col_sched_ref, flags_ref,  # prefetch
                          a_ref, xk_ref,
                          w1_ref, b1_ref, w2_ref, b2_ref,
                          g1_ref, be1_ref, m1_ref, v1_ref,      # encoder BN
                          wp_ref, bp_ref,                       # projection Linear
                          g2_ref, be2_ref, m2_ref, v2_ref,      # projector BN
                          alphas_ref,                           # SMEM (2,)
                          z_ref, p_ref,
                          acc_ref):
    del row_sched_ref, col_sched_ref
    _gin_accumulate(flags_ref, a_ref, xk_ref, acc_ref)

    @pl.when((flags_ref[pl.program_id(0)] & FLAG_LAST) != 0)
    def _epilogue():
        z = _mlp_prelu(acc_ref[...], w1_ref, b1_ref, w2_ref, b2_ref,
                       alphas_ref[0])
        # encoder BatchNorm1d (eval mode, running statistics)
        zn = (z - m1_ref[...]) * jax.lax.rsqrt(v1_ref[...] + BN_EPS) \
            * g1_ref[...] + be1_ref[...]
        z_ref[...] = zn
        # projection head: Linear -> BatchNorm1d -> PReLU -> Dropout(identity)
        p = jnp.dot(zn.astype(jnp.bfloat16), wp_ref[...],
                    preferred_element_type=jnp.float32) + bp_ref[...]
        pn = (p - m2_ref[...]) * jax.lax.rsqrt(v2_ref[...] + BN_EPS) \
            * g2_ref[...] + be2_ref[...]
        p_ref[...] = jnp.where(pn > 0, pn, alphas_ref[1] * pn)


# ---------------------------------------------------------------------------
# pallas_call wrappers
# ---------------------------------------------------------------------------
def _common_specs(tm, tk, din):
    a_spec = pl.BlockSpec((tm, tk), lambda s, rs, cs, fl: (rs[s], cs[s]))
    xk_spec = pl.BlockSpec((tk, din), lambda s, rs, cs, fl: (cs[s], 0))
    return a_spec, xk_spec


def _full_spec(shape):
    # whole-array block, constant index_map -> VMEM-resident across the grid
    return pl.BlockSpec(shape, lambda s, rs, cs, fl: (0, 0))


_SMEM_SPEC = pl.BlockSpec(memory_space=pltpu.MemorySpace.SMEM)
_COMPILER_PARAMS = pltpu.CompilerParams(
    dimension_semantics=("arbitrary",),          # acc carried across blocks
    vmem_limit_bytes=48 * 1024 * 1024)


def gin_layer(adj, z, w1, b1, w2, b2, alpha, sched, tm, tk):
    row_sched, col_sched, flags, nsteps = sched
    n_pad = adj.shape[0]
    din = z.shape[1]
    h_pad = w1.shape[1]
    a_spec, xk_spec = _common_specs(tm, tk, din)

    in_specs = [a_spec, xk_spec,
                _full_spec(w1.shape), _full_spec(b1.shape),
                _full_spec(w2.shape), _full_spec(b2.shape),
                _SMEM_SPEC]
    out_spec = pl.BlockSpec((tm, h_pad), lambda s, rs, cs, fl: (rs[s], 0))

    return pl.pallas_call(
        gin_layer_kernel,
        out_shape=jax.ShapeDtypeStruct((n_pad, h_pad), jnp.bfloat16),
        grid_spec=pltpu.PrefetchScalarGridSpec(
            num_scalar_prefetch=3,
            grid=(nsteps,),
            in_specs=in_specs,
            out_specs=out_spec,
            scratch_shapes=[pltpu.VMEM((tm, din), jnp.float32)]),
        compiler_params=_COMPILER_PARAMS,
    )(row_sched, col_sched, flags, adj, z, w1, b1, w2, b2, alpha)


def gin_last_layer(adj, z, w1, b1, w2, b2, bn1, wp, bp, bn2, alphas,
                   sched, tm, tk):
    row_sched, col_sched, flags, nsteps = sched
    n_pad = adj.shape[0]
    din = z.shape[1]
    h_pad = w1.shape[1]
    a_spec, xk_spec = _common_specs(tm, tk, din)

    vmem_params = (w1, b1, w2, b2, *bn1, wp, bp, *bn2)
    in_specs = [a_spec, xk_spec] \
        + [_full_spec(p.shape) for p in vmem_params] \
        + [_SMEM_SPEC]
    out_specs = [pl.BlockSpec((tm, h_pad), lambda s, rs, cs, fl: (rs[s], 0)),
                 pl.BlockSpec((tm, h_pad), lambda s, rs, cs, fl: (rs[s], 0))]

    return pl.pallas_call(
        gin_last_layer_kernel,
        out_shape=(jax.ShapeDtypeStruct((n_pad, h_pad), jnp.float32),
                   jax.ShapeDtypeStruct((n_pad, h_pad), jnp.float32)),
        grid_spec=pltpu.PrefetchScalarGridSpec(
            num_scalar_prefetch=3,
            grid=(nsteps,),
            in_specs=in_specs,
            out_specs=out_specs,
            scratch_shapes=[pltpu.VMEM((tm, din), jnp.float32)]),
        compiler_params=_COMPILER_PARAMS,
    )(row_sched, col_sched, flags, adj, z, *vmem_params, alphas)


# ---------------------------------------------------------------------------
# GConv forward (glue in plain JAX/numpy, hot path in Pallas)
# ---------------------------------------------------------------------------
def _pad2(a, r, c, fill=0.0):
    a = a.astype(jnp.float32)
    return jnp.pad(a, ((0, r - a.shape[0]), (0, c - a.shape[1])),
                   constant_values=fill)


def gconv_forward(params, x, edge_index, edge_weight=None):
    n, f_in = x.shape
    hidden = params["layers"][0][0].shape[1]
    num_layers = len(params["layers"])

    n_pad, tm, tk = _choose_tiles(n)
    f_pad = _round_up(f_in, LANE)
    h_pad = _round_up(hidden, LANE)

    src, dst = edge_index[0], edge_index[1]
    if edge_weight is None:
        edge_weight = jnp.ones((edge_index.shape[1],), jnp.float32)

    # Dense padded adjacency (duplicate edges sum, matching scatter-add) with
    # the GIN self term (1+eps)*I folded into the diagonal.  Stored bf16:
    # exact for 0/1 edge weights; A is the dominant HBM stream (re-read every
    # layer) so halving its bytes scales the mem-bound inner loop.
    adj = jnp.zeros((n_pad, n_pad), jnp.float32).at[dst, src].add(
        edge_weight.astype(jnp.float32))
    diag = jnp.arange(n_pad)
    adj = adj.at[diag, diag].add(1.0 + GIN_EPS).astype(jnp.bfloat16)

    # Flattened block-sparse schedule (host-side, O(E)); only nonzero blocks
    # of A ever become grid steps, so there are no dead max_k-padded steps.
    sched = _block_schedule(np.asarray(src), np.asarray(dst), n_pad, tm, tk)

    # Inter-layer activations carried in bf16 (halves z HBM traffic, feeds the
    # MXU native bf16 operands).
    z = _pad2(x, n_pad, f_pad).astype(jnp.bfloat16)
    act_alpha = jnp.reshape(params["act_alpha"], (1,)).astype(jnp.float32)

    z_out = p_out = None
    for li, (w1, b1, w2, b2) in enumerate(params["layers"]):
        din_pad = f_pad if li == 0 else h_pad
        w1p = _pad2(w1, din_pad, h_pad).astype(jnp.bfloat16)
        w2p = _pad2(w2, h_pad, h_pad).astype(jnp.bfloat16)
        b1p, b2p = _pad2(b1, 1, h_pad), _pad2(b2, 1, h_pad)
        if li < num_layers - 1:
            z = gin_layer(adj, z, w1p, b1p, w2p, b2p, act_alpha,
                          sched, tm, tk)
        else:
            g1, be1, m1, v1 = params["enc_bn"]
            g2, be2, m2, v2 = params["proj_bn"]
            bn1 = (_pad2(g1, 1, h_pad), _pad2(be1, 1, h_pad),
                   _pad2(m1, 1, h_pad), _pad2(v1, 1, h_pad, fill=1.0))
            bn2 = (_pad2(g2, 1, h_pad), _pad2(be2, 1, h_pad),
                   _pad2(m2, 1, h_pad), _pad2(v2, 1, h_pad, fill=1.0))
            wp = _pad2(params["proj_w"], h_pad, h_pad).astype(jnp.bfloat16)
            bp = _pad2(params["proj_b"], 1, h_pad)
            alphas = jnp.concatenate(
                [jnp.reshape(params["act_alpha"], (1,)),
                 jnp.reshape(params["proj_alpha"], (1,))]).astype(jnp.float32)
            z_out, p_out = gin_last_layer(adj, z, w1p, b1p, w2p, b2p,
                                          bn1, wp, bp, bn2, alphas,
                                          sched, tm, tk)
    return z_out[:n, :hidden], p_out[:n, :hidden]


# ---------------------------------------------------------------------------
# pure-JAX (f32) reference for validation
# ---------------------------------------------------------------------------
def gconv_reference(params, x, edge_index, edge_weight=None):
    n = x.shape[0]
    src, dst = edge_index[0], edge_index[1]
    if edge_weight is None:
        edge_weight = jnp.ones((edge_index.shape[1],), jnp.float32)
    adj = jnp.zeros((n, n), jnp.float32).at[dst, src].add(edge_weight)

    def prelu(v, a):
        return jnp.where(v > 0, v, a * v)

    z = x
    for (w1, b1, w2, b2) in params["layers"]:
        h = adj @ z + (1.0 + GIN_EPS) * z
        h = jnp.maximum(h @ w1 + b1, 0.0)
        h = h @ w2 + b2
        z = prelu(h, params["act_alpha"][0, 0])
    g1, be1, m1, v1 = params["enc_bn"]
    zn = (z - m1) * jax.lax.rsqrt(v1 + BN_EPS) * g1 + be1
    g2, be2, m2, v2 = params["proj_bn"]
    p = zn @ params["proj_w"] + params["proj_b"]
    p = (p - m2) * jax.lax.rsqrt(v2 + BN_EPS) * g2 + be2
    p = prelu(p, params["proj_alpha"][0, 0])
    return zn, p


# ---------------------------------------------------------------------------
def init_params(key, input_dim, hidden_dim, num_layers):
    keys = jax.random.split(key, 4 * num_layers + 10)
    ki = iter(range(len(keys)))

    def lin(k_w, k_b, din, dout):
        # torch Linear stores [out, in]; we keep the transposed [in, out]
        bound = 1.0 / jnp.sqrt(din)
        w = jax.random.uniform(keys[k_w], (din, dout), jnp.float32, -bound, bound)
        b = jax.random.uniform(keys[k_b], (1, dout), jnp.float32, -bound, bound)
        return w, b

    layers = []
    din = input_dim
    for _ in range(num_layers):
        w1, b1 = lin(next(ki), next(ki), din, hidden_dim)
        w2, b2 = lin(next(ki), next(ki), hidden_dim, hidden_dim)
        layers.append((w1, b1, w2, b2))
        din = hidden_dim

    def bn(k_m, k_v):
        gamma = jnp.ones((1, hidden_dim), jnp.float32)
        beta = jnp.zeros((1, hidden_dim), jnp.float32)
        mean = 0.1 * jax.random.normal(keys[k_m], (1, hidden_dim), jnp.float32)
        var = 1.0 + 0.1 * jax.random.uniform(keys[k_v], (1, hidden_dim),
                                             jnp.float32)
        return (gamma, beta, mean, var)

    proj_w, proj_b = lin(next(ki), next(ki), hidden_dim, hidden_dim)
    return {
        "layers": layers,
        "act_alpha": jnp.full((1, 1), 0.25, jnp.float32),     # PReLU init
        "enc_bn": bn(next(ki), next(ki)),
        "proj_w": proj_w,
        "proj_b": proj_b,
        "proj_bn": bn(next(ki), next(ki)),
        "proj_alpha": jnp.full((1, 1), 0.25, jnp.float32),
    }


if __name__ == "__main__":
    N, INPUT_DIM, HIDDEN_DIM, NUM_LAYERS = 16, 8, 32, 2

    key = jax.random.PRNGKey(0)
    k_x, k_p = jax.random.split(key)
    x = jax.random.normal(k_x, (N, INPUT_DIM), jnp.float32)

    # deterministic small graph: bidirectional ring over N nodes
    idx = jnp.arange(N)
    src = jnp.concatenate([idx, (idx + 1) % N])
    dst = jnp.concatenate([(idx + 1) % N, idx])
    edge_index = jnp.stack([src, dst], axis=0)          # [2, 2N]

    params = init_params(k_p, INPUT_DIM, HIDDEN_DIM, NUM_LAYERS)

    z, p = gconv_forward(params, x, edge_index)
    jax.block_until_ready((z, p))

    z_ref, p_ref = gconv_reference(params, x, edge_index)
    # bf16 adjacency / activations / weights -> looser tolerance than pure f32
    assert jnp.allclose(z, z_ref, atol=1.5e-1, rtol=5e-2), \
        f"z mismatch, max abs err {jnp.max(jnp.abs(z - z_ref))}"
    assert jnp.allclose(p, p_ref, atol=1.5e-1, rtol=5e-2), \
        f"p mismatch, max abs err {jnp.max(jnp.abs(p - p_ref))}"
    assert z.shape == (N, HIDDEN_DIM) and p.shape == (N, HIDDEN_DIM)

    print("KERNEL_OK")
</pallas_src>

<mosaic_0001>
module attributes {stable_mosaic.version = 11 : i64} {
  func.func @gin_layer_kernel(%arg0: i32, %arg1: memref<1xi32, #tpu.memory_space<smem>>, %arg2: memref<1xi32, #tpu.memory_space<smem>>, %arg3: memref<1xi32, #tpu.memory_space<smem>>, %arg4: memref<16x16xbf16, #tpu.memory_space<vmem>>, %arg5: memref<16x128xbf16, #tpu.memory_space<vmem>>, %arg6: memref<128x128xbf16, #tpu.memory_space<vmem>>, %arg7: memref<1x128xf32, #tpu.memory_space<vmem>>, %arg8: memref<128x128xbf16, #tpu.memory_space<vmem>>, %arg9: memref<1x128xf32, #tpu.memory_space<vmem>>, %arg10: memref<1xf32, #tpu.memory_space<smem>>, %arg11: memref<16x128xbf16, #tpu.memory_space<vmem>>, %arg12: memref<16x128xf32, #tpu.memory_space<vmem>>) attributes {dimension_semantics = [#tpu.dimension_semantics<arbitrary>], iteration_bounds = array<i64: 1>, scalar_prefetch = 3 : i64, scratch_operands = 1 : i64, tpu.core_type = #tpu.core_type<tc>, window_params = [{transform_indices = @transform_0, window_bounds = array<i64: 16, 16>}, {transform_indices = @transform_1, window_bounds = array<i64: 16, 128>}, {pipeline_mode = #tpu.pipeline_mode<synchronous>, transform_indices = @transform_2, window_bounds = array<i64: 128, 128>}, {pipeline_mode = #tpu.pipeline_mode<synchronous>, transform_indices = @transform_3, window_bounds = array<i64: 1, 128>}, {pipeline_mode = #tpu.pipeline_mode<synchronous>, transform_indices = @transform_4, window_bounds = array<i64: 128, 128>}, {pipeline_mode = #tpu.pipeline_mode<synchronous>, transform_indices = @transform_5, window_bounds = array<i64: 1, 128>}, {transform_indices = @transform_6, window_bounds = array<i64: 1>}, {transform_indices = @transform_7, window_bounds = array<i64: 16, 128>}]} {
    %0 = arith.index_cast %arg0 : i32 to index
    %1 = memref.load %arg3[%0] : memref<1xi32, #tpu.memory_space<smem>>
    %c1_i32 = arith.constant 1 : i32
    %2 = arith.andi %1, %c1_i32 : i32
    %c0_i32 = arith.constant 0 : i32
    %3 = arith.cmpi ne, %2, %c0_i32 : i32
    %4 = arith.extui %3 : i1 to i32
    %c0_i32_0 = arith.constant 0 : i32
    %5 = arith.cmpi ne, %4, %c0_i32_0 : i32
    scf.if %5 {
      %cst_10 = arith.constant 0.000000e+00 : f32
      %18 = vector.broadcast %cst_10 : f32 to vector<16x128xf32>
      %c0_11 = arith.constant 0 : index
      %c0_12 = arith.constant 0 : index
      %19 = vector.load %arg12[%c0_11, %c0_12] : memref<16x128xf32, #tpu.memory_space<vmem>>, vector<16x128xf32>
      tpu.vector_store %arg12[%c0_11, %c0_12], %18 {strides = array<i32>} : memref<16x128xf32, #tpu.memory_space<vmem>>, vector<16x128xf32>,
    } else {
    }
    %c0 = arith.constant 0 : index
    %c0_1 = arith.constant 0 : index
    %6 = vector.load %arg12[%c0, %c0_1] : memref<16x128xf32, #tpu.memory_space<vmem>>, vector<16x128xf32>
    %c0_2 = arith.constant 0 : index
    %c0_3 = arith.constant 0 : index
    %7 = vector.load %arg4[%c0_2, %c0_3] : memref<16x16xbf16, #tpu.memory_space<vmem>>, vector<16x16xbf16>
    %c0_4 = arith.constant 0 : index
    %c0_5 = arith.constant 0 : index
    %8 = vector.load %arg5[%c0_4, %c0_5] : memref<16x128xbf16, #tpu.memory_space<vmem>>, vector<16x128xbf16>
    %cst = arith.constant dense<0.000000e+00> : vector<16x128xf32>
    %9 = tpu.matmul %7, %8, %cst {dimension_numbers = #tpu.dot_dimension_numbers<[1], [0], [0], [1], [0, 0, 1, 1], [], []>} : vector<16x16xbf16>, vector<16x128xbf16>, vector<16x128xf32> -> vector<16x128xf32>
    %10 = arith.addf %6, %9 : vector<16x128xf32>
    %c0_6 = arith.constant 0 : index
    %c0_7 = arith.constant 0 : index
    %11 = vector.load %arg12[%c0_6, %c0_7] : memref<16x128xf32, #tpu.memory_space<vmem>>, vector<16x128xf32>
    tpu.vector_store %arg12[%c0_6, %c0_7], %10 {strides = array<i32>} : memref<16x128xf32, #tpu.memory_space<vmem>>, vector<16x128xf32>,
    %12 = arith.index_cast %arg0 : i32 to index
    %13 = memref.load %arg3[%12] : memref<1xi32, #tpu.memory_space<smem>>
    %c2_i32 = arith.constant 2 : i32
    %14 = arith.andi %13, %c2_i32 : i32
    %c0_i32_8 = arith.constant 0 : i32
    %15 = arith.cmpi ne, %14, %c0_i32_8 : i32
    %16 = arith.extui %15 : i1 to i32
    %c0_i32_9 = arith.constant 0 : i32
    %17 = arith.cmpi ne, %16, %c0_i32_9 : i32
    scf.if %17 {
      %c0_10 = arith.constant 0 : index
      %c0_11 = arith.constant 0 : index
      %18 = vector.load %arg12[%c0_10, %c0_11] : memref<16x128xf32, #tpu.memory_space<vmem>>, vector<16x128xf32>
      %c0_12 = arith.constant 0 : index
      %19 = memref.load %arg10[%c0_12] : memref<1xf32, #tpu.memory_space<smem>>
      %20 = arith.truncf %18 : vector<16x128xf32> to vector<16x128xbf16>
      %c0_13 = arith.constant 0 : index
      %c0_14 = arith.constant 0 : index
      %21 = vector.load %arg6[%c0_13, %c0_14] : memref<128x128xbf16, #tpu.memory_space<vmem>>, vector<128x128xbf16>
      %cst_15 = arith.constant dense<0.000000e+00> : vector<16x128xf32>
      %22 = tpu.matmul %20, %21, %cst_15 {dimension_numbers = #tpu.dot_dimension_numbers<[1], [0], [0], [1], [0, 0, 1, 1], [], []>} : vector<16x128xbf16>, vector<128x128xbf16>, vector<16x128xf32> -> vector<16x128xf32>
      %c0_16 = arith.constant 0 : index
      %c0_17 = arith.constant 0 : index
      %23 = vector.load %arg7[%c0_16, %c0_17] : memref<1x128xf32, #tpu.memory_space<vmem>>, vector<1x128xf32>
      %24 = vector.broadcast %23 : vector<1x128xf32> to vector<16x128xf32>
      %25 = arith.addf %22, %24 : vector<16x128xf32>
      %cst_18 = arith.constant 0.000000e+00 : f32
      %26 = vector.broadcast %cst_18 : f32 to vector<16x128xf32>
      %27 = arith.maximumf %25, %26 : vector<16x128xf32>
      %28 = arith.truncf %27 : vector<16x128xf32> to vector<16x128xbf16>
      %c0_19 = arith.constant 0 : index
      %c0_20 = arith.constant 0 : index
      %29 = vector.load %arg8[%c0_19, %c0_20] : memref<128x128xbf16, #tpu.memory_space<vmem>>, vector<128x128xbf16>
      %cst_21 = arith.constant dense<0.000000e+00> : vector<16x128xf32>
      %30 = tpu.matmul %28, %29, %cst_21 {dimension_numbers = #tpu.dot_dimension_numbers<[1], [0], [0], [1], [0, 0, 1, 1], [], []>} : vector<16x128xbf16>, vector<128x128xbf16>, vector<16x128xf32> -> vector<16x128xf32>
      %c0_22 = arith.constant 0 : index
      %c0_23 = arith.constant 0 : index
      %31 = vector.load %arg9[%c0_22, %c0_23] : memref<1x128xf32, #tpu.memory_space<vmem>>, vector<1x128xf32>
      %32 = vector.broadcast %31 : vector<1x128xf32> to vector<16x128xf32>
      %33 = arith.addf %30, %32 : vector<16x128xf32>
      %cst_24 = arith.constant 0.000000e+00 : f32
      %34 = vector.broadcast %cst_24 : f32 to vector<16x128xf32>
      %35 = arith.cmpf ogt, %33, %34 : vector<16x128xf32>
      %36 = vector.broadcast %19 : f32 to vector<16x128xf32>
      %37 = arith.mulf %36, %33 : vector<16x128xf32>
      %38 = arith.select %35, %33, %37 : vector<16x128xi1>, vector<16x128xf32>
      %39 = arith.truncf %38 : vector<16x128xf32> to vector<16x128xbf16>
      %c0_25 = arith.constant 0 : index
      %c0_26 = arith.constant 0 : index
      %40 = vector.load %arg11[%c0_25, %c0_26] : memref<16x128xbf16, #tpu.memory_space<vmem>>, vector<16x128xbf16>
      tpu.vector_store %arg11[%c0_25, %c0_26], %39 {strides = array<i32>} : memref<16x128xbf16, #tpu.memory_space<vmem>>, vector<16x128xbf16>,
    } else {
    }
    return
  }
  func.func @transform_0(%arg0: i32, %arg1: memref<1xi32, #tpu.memory_space<smem>>, %arg2: memref<1xi32, #tpu.memory_space<smem>>, %arg3: memref<1xi32, #tpu.memory_space<smem>>) -> (i32, i32) {
    %0 = arith.index_cast %arg0 : i32 to index
    %1 = memref.load %arg1[%0] : memref<1xi32, #tpu.memory_space<smem>>
    %2 = arith.index_cast %arg0 : i32 to index
    %3 = memref.load %arg2[%2] : memref<1xi32, #tpu.memory_space<smem>>
    %c0_i32 = arith.constant 0 : i32
    return %1, %3 : i32, i32
  }
  func.func @transform_1(%arg0: i32, %arg1: memref<1xi32, #tpu.memory_space<smem>>, %arg2: memref<1xi32, #tpu.memory_space<smem>>, %arg3: memref<1xi32, #tpu.memory_space<smem>>) -> (i32, i32) {
    %0 = arith.index_cast %arg0 : i32 to index
    %1 = memref.load %arg2[%0] : memref<1xi32, #tpu.memory_space<smem>>
    %c0_i32 = arith.constant 0 : i32
    %c0_i32_0 = arith.constant 0 : i32
    return %1, %c0_i32 : i32, i32
  }
  func.func @transform_2(%arg0: i32, %arg1: memref<1xi32, #tpu.memory_space<smem>>, %arg2: memref<1xi32, #tpu.memory_space<smem>>, %arg3: memref<1xi32, #tpu.memory_space<smem>>) -> (i32, i32) {
    %c0_i32 = arith.constant 0 : i32
    %c0_i32_0 = arith.constant 0 : i32
    %c0_i32_1 = arith.constant 0 : i32
    return %c0_i32, %c0_i32_0 : i32, i32
  }
  func.func @transform_3(%arg0: i32, %arg1: memref<1xi32, #tpu.memory_space<smem>>, %arg2: memref<1xi32, #tpu.memory_space<smem>>, %arg3: memref<1xi32, #tpu.memory_space<smem>>) -> (i32, i32) {
    %c0_i32 = arith.constant 0 : i32
    %c0_i32_0 = arith.constant 0 : i32
    %c0_i32_1 = arith.constant 0 : i32
    return %c0_i32, %c0_i32_0 : i32, i32
  }
  func.func @transform_4(%arg0: i32, %arg1: memref<1xi32, #tpu.memory_space<smem>>, %arg2: memref<1xi32, #tpu.memory_space<smem>>, %arg3: memref<1xi32, #tpu.memory_space<smem>>) -> (i32, i32) {
    %c0_i32 = arith.constant 0 : i32
    %c0_i32_0 = arith.constant 0 : i32
    %c0_i32_1 = arith.constant 0 : i32
    return %c0_i32, %c0_i32_0 : i32, i32
  }
  func.func @transform_5(%arg0: i32, %arg1: memref<1xi32, #tpu.memory_space<smem>>, %arg2: memref<1xi32, #tpu.memory_space<smem>>, %arg3: memref<1xi32, #tpu.memory_space<smem>>) -> (i32, i32) {
    %c0_i32 = arith.constant 0 : i32
    %c0_i32_0 = arith.constant 0 : i32
    %c0_i32_1 = arith.constant 0 : i32
    return %c0_i32, %c0_i32_0 : i32, i32
  }
  func.func @transform_6(%arg0: i32, %arg1: memref<1xi32, #tpu.memory_space<smem>>, %arg2: memref<1xi32, #tpu.memory_space<smem>>, %arg3: memref<1xi32, #tpu.memory_space<smem>>) -> i32 {
    %c0_i32 = arith.constant 0 : i32
    %c0_i32_0 = arith.constant 0 : i32
    return %c0_i32 : i32
  }
  func.func @transform_7(%arg0: i32, %arg1: memref<1xi32, #tpu.memory_space<smem>>, %arg2: memref<1xi32, #tpu.memory_space<smem>>, %arg3: memref<1xi32, #tpu.memory_space<smem>>) -> (i32, i32) {
    %0 = arith.index_cast %arg0 : i32 to index
    %1 = memref.load %arg1[%0] : memref<1xi32, #tpu.memory_space<smem>>
    %c0_i32 = arith.constant 0 : i32
    %c0_i32_0 = arith.constant 0 : i32
    return %1, %c0_i32 : i32, i32
  }
}

</mosaic_0001>

<llo_original>
// kernel: tpu_custom_call.1
$region0: #{tpu_custom_call.1}
  #allocation0 [shape = 'u32[]', space=smem, size = 0x4, offset = 0x4, fixed_abs, tag = 'smem constant byte address 0x4 - core index']
  #allocation1 [shape = 'u32[72,128]{1,0:T(1,128)}', space=vmem, size = 0x9000, scoped, tag = 'internal scratch']
  #allocation2 [shape = 'f32[16,128]{1,0:T(8,128)}', space=vmem, size = 0x2000, scoped, tag = 'scratch operand']
  #allocation3 [shape = 's32[1]{0}', space=sflag, size = 0x4, scoped, tag = 'scoped memory for tpu_custom_call.1']
  #allocation4 [shape = 's32[1]{0:T(128)S(6)}', space=smem, size = 0x200, scoped, tag = 'prefetched SMEM operand 0']
  #allocation5 [shape = 's32[1]{0:T(128)S(6)}', space=smem, size = 0x200, scoped, tag = 'prefetched SMEM operand 1']
  #allocation6 [shape = 's32[1]{0:T(128)S(6)}', space=smem, size = 0x200, scoped, tag = 'prefetched SMEM operand 2']
  #allocation7 [shape = 'f32[1]{0:T(128)S(6)}', space=smem, size = 0x200, scoped, tag = 'scoped memory for tpu_custom_call.1']
  %s0 = inlined_call_operand.<no memory space> [shape: s32[1], index: 0, kind: input, shape index: {}]
  %s1 = inlined_call_operand.<no memory space> [shape: s32[1], index: 1, kind: input, shape index: {}]
  %s2 = inlined_call_operand.<no memory space> [shape: s32[1], index: 2, kind: input, shape index: {}]
  %s3 = inlined_call_operand.hbm [shape: bf16[16,16], index: 3, kind: input, shape index: {}]
  %s4 = inlined_call_operand.vmem [shape: bf16[16,128], index: 4, kind: input, shape index: {}]
  %s5 = inlined_call_operand.hbm [shape: bf16[128,128], index: 5, kind: input, shape index: {}]
  %s6 = inlined_call_operand.vmem [shape: f32[1,128], index: 6, kind: input, shape index: {}]
  %s7 = inlined_call_operand.hbm [shape: bf16[128,128], index: 7, kind: input, shape index: {}]
  %s8 = inlined_call_operand.vmem [shape: f32[1,128], index: 8, kind: input, shape index: {}]
  %s9 = inlined_call_operand.<no memory space> [shape: f32[1], index: 9, kind: input, shape index: {}]
  %s10 = inlined_call_operand.hbm [shape: bf16[16,128], index: 10, kind: output, shape index: {}]
  %s11 = sld [smem:[#allocation0]]
  $region58: #{tpu_custom_call.1} parent=0
    _
  %s13 = ssub.s32 1, %s11
  %s14 = scalar_select 0, %s13, %s11
  %15 = sst [smem:[#allocation4]] %s0
  %16 = sst [smem:[#allocation5]] %s1
  %17 = sst [smem:[#allocation6]] %s2
  %18 = sst [smem:[#allocation7]] %s9
  $region1: #{tpu_custom_call.1} parent=0
    #allocation8 [shape = 'u8[4096]{0}', space=vmem, size = 0x1000, scoped, tag = 'input window, operand 3, single buffered']
    #allocation9 [shape = 's32[1]{0}', space=sflag, size = 0x4, scoped, tag = 'scoped memory for tpu_custom_call.1']
    #allocation10 [shape = 's32[1]{0}', space=sflag, size = 0x4, scoped, tag = 'scoped memory for tpu_custom_call.1']
    #allocation11 [shape = 'u8[32768]{0}', space=vmem, size = 0x8000, scoped, tag = 'input window, operand 5, single buffered']
    #allocation12 [shape = 's32[1]{0}', space=sflag, size = 0x4, scoped, tag = 'scoped memory for tpu_custom_call.1']
    #allocation13 [shape = 'u8[32768]{0}', space=vmem, size = 0x8000, scoped, tag = 'input window, operand 7, single buffered']
    #allocation14 [shape = 'u8[4096]{0}', space=vmem, size = 0x1000, scoped, tag = 'output window, operand 0, single buffered']
    %19 = vsyncpa [#allocation9], 0
    %20 = vsyncpa [#allocation12], 0
    %21 = vsyncpa [#allocation10], 0
    // Predicated region
    $region2: #{tpu_custom_call.1} parent=1 // pred_check
      _
    $region3: #{tpu_custom_call.1} parent=1 // pred_check_branch
      %23 = sbr.rel (0) target = $region5
    $region4: #{tpu_custom_call.1} parent=1 // pred_region
      %s24 = sld [smem:[#allocation4]]
      %s25 = sld [smem:[#allocation5]]
      %s26 = smul.u32 2, %s24
      %28 = vsyncadd [#allocation9], 0
      %s29 = sadd.s32 %s25, %s26
      %s30 = smul.addr %s29, 4
      %s31 = scalar_lea.hbm %s3, %s30
      %s32 = sshll.u32 %s31, 4
      %s33 = int_to_ptr.hbm [resolvable:$true] %s32
      %s34 = sshll.u32 [#allocation8], 4
      %s35 = int_to_ptr.vmem [resolvable:$true] %s34
      %40 = dma.hbm_to_vmem [thread:$0]  %s33, 128, %s35, [#allocation9], 64, 64, 4
    $region5: #{tpu_custom_call.1} parent=1 // pred_fallthru
      _
    // Predicated region
    $region6: #{tpu_custom_call.1} parent=1 // pred_check
      _
    $region7: #{tpu_custom_call.1} parent=1 // pred_check_branch
      %42 = sbr.rel (0) target = $region9
    $region8: #{tpu_custom_call.1} parent=1 // pred_region
      %s43 = sld [smem:[#allocation5]]
      %s44 = smul.u32 2, %s43
      %p45 = scmp.lt.s32.totalorder %s44, 1
      %s46 = scalar_select %p45, %s44, 1
      %s47 = smul.addr %s46, 4
      %s48 = scalar_lea.vmem %s4, %s47
      %s49 = sld [smem:[#allocation5]]
      %s50 = smul.u32 2, %s49
    $region9: #{tpu_custom_call.1} parent=1 // pred_fallthru
      _
    // Predicated region
    $region10: #{tpu_custom_call.1} parent=1 // pred_check
      _
    $region11: #{tpu_custom_call.1} parent=1 // pred_check_branch
      %52 = sbr.rel (0) target = $region13
    $region12: #{tpu_custom_call.1} parent=1 // pred_region
      %54 = vsyncadd [#allocation12], 0
      %s55 = sshll.u32 %s5, 4
      %s56 = int_to_ptr.hbm [resolvable:$true] %s55
      %s57 = sshll.u32 [#allocation11], 4
      %s58 = int_to_ptr.vmem [resolvable:$true] %s57
      %63 = dma.hbm_to_vmem [thread:$0]  %s56, 1024, %s58, [#allocation12], 64, 64, 4
    $region13: #{tpu_custom_call.1} parent=1 // pred_fallthru
      _
    // Predicated region
    $region14: #{tpu_custom_call.1} parent=1 // pred_check
      _
    $region15: #{tpu_custom_call.1} parent=1 // pred_check_branch
      %65 = sbr.rel (0) target = $region17
    $region16: #{tpu_custom_call.1} parent=1 // pred_region
      _
    $region17: #{tpu_custom_call.1} parent=1 // pred_fallthru
      _
    // Predicated region
    $region18: #{tpu_custom_call.1} parent=1 // pred_check
      _
    $region19: #{tpu_custom_call.1} parent=1 // pred_check_branch
      %67 = sbr.rel (0) target = $region21
    $region20: #{tpu_custom_call.1} parent=1 // pred_region
      %69 = vsyncadd [#allocation12], 0
      %s70 = sshll.u32 %s7, 4
      %s71 = int_to_ptr.hbm [resolvable:$true] %s70
      %s72 = sshll.u32 [#allocation13], 4
      %s73 = int_to_ptr.vmem [resolvable:$true] %s72
      %78 = dma.hbm_to_vmem [thread:$0]  %s71, 1024, %s73, [#allocation12], 64, 64, 4
    $region21: #{tpu_custom_call.1} parent=1 // pred_fallthru
      _
    // Predicated region
    $region22: #{tpu_custom_call.1} parent=1 // pred_check
      _
    $region23: #{tpu_custom_call.1} parent=1 // pred_check_branch
      %80 = sbr.rel (0) target = $region25
    $region24: #{tpu_custom_call.1} parent=1 // pred_region
      _
    $region25: #{tpu_custom_call.1} parent=1 // pred_fallthru
      _
    // Predicated region
    $region26: #{tpu_custom_call.1} parent=1 // pred_check
      _
    $region27: #{tpu_custom_call.1} parent=1 // pred_check_branch
      %82 = sbr.rel (0) target = $region29
    $region28: #{tpu_custom_call.1} parent=1 // pred_region
      _
    $region29: #{tpu_custom_call.1} parent=1 // pred_fallthru
      _
    // Predicated region
    $region30: #{tpu_custom_call.1} parent=1 // pred_check
      _
    $region31: #{tpu_custom_call.1} parent=1 // pred_check_branch
      %84 = sbr.rel (0) target = $region33
    $region32: #{tpu_custom_call.1} parent=1 // pred_region
      %86 = dma.done [#allocation9], 128
    $region33: #{tpu_custom_call.1} parent=1 // pred_fallthru
      _
    // Predicated region
    $region34: #{tpu_custom_call.1} parent=1 // pred_check
      _
    $region35: #{tpu_custom_call.1} parent=1 // pred_check_branch
      %88 = sbr.rel (0) target = $region37
    $region36: #{tpu_custom_call.1} parent=1 // pred_region
      %90 = dma.done [#allocation12], 1024
    $region37: #{tpu_custom_call.1} parent=1 // pred_fallthru
      _
    // Predicated region
    $region38: #{tpu_custom_call.1} parent=1 // pred_check
      _
    $region39: #{tpu_custom_call.1} parent=1 // pred_check_branch
      %92 = sbr.rel (0) target = $region41
    $region40: #{tpu_custom_call.1} parent=1 // pred_region
      %94 = dma.done [#allocation12], 1024
    $region41: #{tpu_custom_call.1} parent=1 // pred_fallthru
      _
    %s95 = sld [smem:[#allocation5]]
    %s96 = smul.u32 2, %s95
    %p97 = scmp.lt.s32.totalorder %s96, 1
    %s98 = scalar_select %p97, %s96, 1
    %s99 = smul.addr %s98, 4
    %s100 = scalar_lea.vmem %s4, %s99
    %s101 = sld [smem:[#allocation4]]
    %s102 = sld [smem:[#allocation5]]
    %s103 = smul.u32 2, %s101
    %s104 = sld [smem:[#allocation5]]
    %s105 = smul.u32 2, %s104
    %p106 = scmp.lt.s32.totalorder %s105, 1
    %s107 = scalar_select %p106, %s105, 1
    %s108 = smul.addr %s107, 4
    %s109 = scalar_lea.vmem %s4, %s108
    %s110 = sld [smem:[#allocation5]]
    %s111 = smul.u32 2, %s110
    %s112 = sld [smem:[#allocation4]]
    %s113 = smul.u32 2, %s112
    %s115 = sld [smem:[#allocation6]]
    %s116 = sand.u32 %s115, 1
    %p117 = scmp.ne.s32.totalorder %s116, 0
    // Predicated region
    $region42: #{tpu_custom_call.1} parent=1 // pred_check
      %p118 = pneg %p117
    $region43: #{tpu_custom_call.1} parent=1 // pred_check_branch
      %120 = sbr.rel (%p118) target = $region45
    $region44: #{tpu_custom_call.1} parent=1 // pred_region
      %121 = vst [vmem:[#allocation2] sm:$0xff] 0.0
      %122 = vst [vmem:[#allocation2 + $0x8] sm:$0xff] 0.0
    $region45: #{tpu_custom_call.1} parent=1 // pred_fallthru
      _
    %v123 = vld [vmem:[#allocation2] sm:$0xff]
    %v124 = vld [vmem:[#allocation2 + $0x8] sm:$0xff]
    %v125 = vld [vmem:[#allocation8] sm:$0xf]
    %v126 = vld [vmem:[#allocation8 + $0x4] sm:$0xf]
    %v127 = vld [vmem:[%s109] sm:$0xf]
    %v128 = vld [vmem:[%s109 + $0x4] sm:$0xf]
    %v131 = vunpack.c.l.b16 %v125
    %v132 = vunpack.c.l.b16 %v126
    %v133 = vpack.c.b16 %v132, %v131
    %v136 = vunpack.c.l.b16 %v127
    %v137 = vunpack.c.l.b16 %v128
    %v138 = vpack.c.b16 %v137, %v136
    %vm140 = vcmask 130048
    %v142 = vsel %vm140, %v133, 0
    %144 = vmatpush.bf16.msra.mxu0 0
    %145 = vmatpush.bf16.msra.mxu0 0
    %146 = vmatpush.bf16.msra.mxu0 0
    %147 = vmatpush.bf16.msra.mxu0 0
    %148 = vmatpush.bf16.msra.mxu0 0
    %149 = vmatpush.bf16.msra.mxu0 0
    %150 = vmatpush.bf16.msra.mxu0 0
    %151 = vmatpush.bf16.msra.mxu0 %v138
    %152 = vmatmul.bf16.gmra.mxu0 %v142
    %v153 = vpop.f32.mrf.mxu0
    %v154 = vadd.f32 0.0, %v153
    %v155 = vpop.f32.mrf.mxu0
    %v156 = vadd.f32 0.0, %v155
    %157 = vdwg.mxu0
    %v158 = vadd.f32 %v123, %v154
    %v159 = vadd.f32 %v124, %v156
    %160 = vst [vmem:[#allocation2] sm:$0xff] %v158
    %161 = vst [vmem:[#allocation2 + $0x8] sm:$0xff] %v159
    %s162 = sld [smem:[#allocation6]]
    %s163 = sand.u32 %s162, 2
    %p164 = scmp.ne.s32.totalorder %s163, 0
    // Predicated region
    $region46: #{tpu_custom_call.1} parent=1 // pred_check
      %p165 = pneg %p164
    $region47: #{tpu_custom_call.1} parent=1 // pred_check_branch
      %167 = sbr.rel (%p165) target = $region49
    $region48: #{tpu_custom_call.1} parent=1 // pred_region
      %v168 = vld [vmem:[#allocation2] sm:$0xff]
      %v169 = vld [vmem:[#allocation2 + $0x8] sm:$0xff]
      %s170 = sld [smem:[#allocation7]]
      %v171 = vpack.c.bf16 %v169, %v168
      %v172 = vld [vmem:[#allocation11] sm:$0xf]
      %v173 = vld [vmem:[#allocation11 + $0x4] sm:$0xf]
      %v174 = vld [vmem:[#allocation11 + $0x8] sm:$0xf]
      %v175 = vld [vmem:[#allocation11 + $0xc] sm:$0xf]
      %v176 = vld [vmem:[#allocation11 + $0x10] sm:$0xf]
      %v177 = vld [vmem:[#allocation11 + $0x14] sm:$0xf]
      %v178 = vld [vmem:[#allocation11 + $0x18] sm:$0xf]
      %v179 = vld [vmem:[#allocation11 + $0x1c] sm:$0xf]
      %v180 = vld [vmem:[#allocation11 + $0x20] sm:$0xf]
      %v181 = vld [vmem:[#allocation11 + $0x24] sm:$0xf]
      %v182 = vld [vmem:[#allocation11 + $0x28] sm:$0xf]
      %v183 = vld [vmem:[#allocation11 + $0x2c] sm:$0xf]
      %v184 = vld [vmem:[#allocation11 + $0x30] sm:$0xf]
      %v185 = vld [vmem:[#allocation11 + $0x34] sm:$0xf]
      %v186 = vld [vmem:[#allocation11 + $0x38] sm:$0xf]
      %v187 = vld [vmem:[#allocation11 + $0x3c] sm:$0xf]
      %v188 = vld [vmem:[%s6] sm:$0x1]
      %v190 = vperm.slane %v188, 0
      %v208 = vunpack.c.l.b16 %v172
      %v209 = vunpack.c.l.b16 %v173
      %v210 = vunpack.c.l.b16 %v174
      %v211 = vunpack.c.l.b16 %v175
      %v212 = vunpack.c.l.b16 %v176
      %v213 = vunpack.c.l.b16 %v177
      %v214 = vunpack.c.l.b16 %v178
      %v215 = vunpack.c.l.b16 %v179
      %v216 = vunpack.c.l.b16 %v180
      %v217 = vunpack.c.l.b16 %v181
      %v218 = vunpack.c.l.b16 %v182
      %v219 = vunpack.c.l.b16 %v183
      %v220 = vunpack.c.l.b16 %v184
      %v221 = vunpack.c.l.b16 %v185
      %v222 = vunpack.c.l.b16 %v186
      %v223 = vunpack.c.l.b16 %v187
      %v224 = vpack.c.b16 %v209, %v208
      %v225 = vpack.c.b16 %v211, %v210
      %v226 = vpack.c.b16 %v213, %v212
      %v227 = vpack.c.b16 %v215, %v214
      %v228 = vpack.c.b16 %v217, %v216
      %v229 = vpack.c.b16 %v219, %v218
      %v230 = vpack.c.b16 %v221, %v220
      %v231 = vpack.c.b16 %v223, %v222
      %240 = vmatpush.bf16.msra.mxu0 %v231
      %241 = vmatpush.bf16.msra.mxu0 %v230
      %242 = vmatpush.bf16.msra.mxu0 %v229
      %243 = vmatpush.bf16.msra.mxu0 %v228
      %244 = vmatpush.bf16.msra.mxu0 %v227
      %245 = vmatpush.bf16.msra.mxu0 %v226
      %246 = vmatpush.bf16.msra.mxu0 %v225
      %247 = vmatpush.bf16.msra.mxu0 %v224
      %248 = vmatmul.bf16.gmra.mxu0 %v171
      %v249 = vpop.f32.mrf.mxu0
      %v250 = vadd.f32 %v190, %v249
      %v251 = vpop.f32.mrf.mxu0
      %v252 = vadd.f32 %v190, %v251
      %253 = vdwg.mxu0
      %v254 = vmax.f32 %v250, 0.0
      %v255 = vmax.f32 %v252, 0.0
      %v256 = vpack.c.bf16 %v255, %v254
      %v257 = vld [vmem:[#allocation13] sm:$0xf]
      %v258 = vld [vmem:[#allocation13 + $0x4] sm:$0xf]
      %v259 = vld [vmem:[#allocation13 + $0x8] sm:$0xf]
      %v260 = vld [vmem:[#allocation13 + $0xc] sm:$0xf]
      %v261 = vld [vmem:[#allocation13 + $0x10] sm:$0xf]
      %v262 = vld [vmem:[#allocation13 + $0x14] sm:$0xf]
      %v263 = vld [vmem:[#allocation13 + $0x18] sm:$0xf]
      %v264 = vld [vmem:[#allocation13 + $0x1c] sm:$0xf]
      %v265 = vld [vmem:[#allocation13 + $0x20] sm:$0xf]
      %v266 = vld [vmem:[#allocation13 + $0x24] sm:$0xf]
      %v267 = vld [vmem:[#allocation13 + $0x28] sm:$0xf]
      %v268 = vld [vmem:[#allocation13 + $0x2c] sm:$0xf]
      %v269 = vld [vmem:[#allocation13 + $0x30] sm:$0xf]
      %v270 = vld [vmem:[#allocation13 + $0x34] sm:$0xf]
      %v271 = vld [vmem:[#allocation13 + $0x38] sm:$0xf]
      %v272 = vld [vmem:[#allocation13 + $0x3c] sm:$0xf]
      %v273 = vld [vmem:[%s8] sm:$0x1]
      %v275 = vperm.slane %v273, 0
      %v293 = vunpack.c.l.b16 %v257
      %v294 = vunpack.c.l.b16 %v258
      %v295 = vunpack.c.l.b16 %v259
      %v296 = vunpack.c.l.b16 %v260
      %v297 = vunpack.c.l.b16 %v261
      %v298 = vunpack.c.l.b16 %v262
      %v299 = vunpack.c.l.b16 %v263
      %v300 = vunpack.c.l.b16 %v264
      %v301 = vunpack.c.l.b16 %v265
      %v302 = vunpack.c.l.b16 %v266
      %v303 = vunpack.c.l.b16 %v267
      %v304 = vunpack.c.l.b16 %v268
      %v305 = vunpack.c.l.b16 %v269
      %v306 = vunpack.c.l.b16 %v270
      %v307 = vunpack.c.l.b16 %v271
      %v308 = vunpack.c.l.b16 %v272
      %v309 = vpack.c.b16 %v294, %v293
      %v310 = vpack.c.b16 %v296, %v295
      %v311 = vpack.c.b16 %v298, %v297
      %v312 = vpack.c.b16 %v300, %v299
      %v313 = vpack.c.b16 %v302, %v301
      %v314 = vpack.c.b16 %v304, %v303
      %v315 = vpack.c.b16 %v306, %v305
      %v316 = vpack.c.b16 %v308, %v307
      %325 = vmatpush.bf16.msra.mxu0 %v316
      %326 = vmatpush.bf16.msra.mxu0 %v315
      %327 = vmatpush.bf16.msra.mxu0 %v314
      %328 = vmatpush.bf16.msra.mxu0 %v313
      %329 = vmatpush.bf16.msra.mxu0 %v312
      %330 = vmatpush.bf16.msra.mxu0 %v311
      %331 = vmatpush.bf16.msra.mxu0 %v310
      %332 = vmatpush.bf16.msra.mxu0 %v309
      %333 = vmatmul.bf16.gmra.mxu0 %v256
      %v334 = vpop.f32.mrf.mxu0
      %v335 = vadd.f32 %v275, %v334
      %v336 = vpop.f32.mrf.mxu0
      %v337 = vadd.f32 %v275, %v336
      %338 = vdwg.mxu0
      %vm339 = vcmp.gt.f32.partialorder %v335, 0.0
      %vm340 = vcmp.gt.f32.partialorder %v337, 0.0
      %v341 = vstv %s170
      %v342 = vmul.f32 %v341, %v335
      %v343 = vmul.f32 %v341, %v337
      %v344 = vsel %vm339, %v335, %v342
      %v345 = vsel %vm340, %v337, %v343
      %v346 = vpack.c.bf16 %v344, %v344
      %v347 = vpack.c.bf16 %v345, %v345
      %348 = vst [vmem:[#allocation14] sm:$0xf] %v346
      %349 = vst [vmem:[#allocation14 + $0x4] sm:$0xf] %v347
    $region49: #{tpu_custom_call.1} parent=1 // pred_fallthru
      _
    // Predicated region
    $region50: #{tpu_custom_call.1} parent=1 // pred_check
      _
    $region51: #{tpu_custom_call.1} parent=1 // pred_check_branch
      %351 = sbr.rel (0) target = $region53
    $region52: #{tpu_custom_call.1} parent=1 // pred_region
      %s352 = sld [smem:[#allocation4]]
      %s353 = smul.u32 2, %s352
      %355 = vsyncadd [#allocation10], 0
      %s356 = smul.addr %s353, 4
      %s357 = scalar_lea.hbm %s10, %s356
      %s358 = sshll.u32 [#allocation14], 4
      %s359 = int_to_ptr.vmem [resolvable:$true] %s358
      %s360 = sshll.u32 %s357, 4
      %s361 = int_to_ptr.hbm [resolvable:$true] %s360
      %366 = dma.vmem_to_hbm [thread:$0]  %s359, 128, %s361, [#allocation10], 64, 64, 4
    $region53: #{tpu_custom_call.1} parent=1 // pred_fallthru
      _
    // Predicated region
    $region54: #{tpu_custom_call.1} parent=1 // pred_check
      _
    $region55: #{tpu_custom_call.1} parent=1 // pred_check_branch
      %368 = sbr.rel (0) target = $region57
    $region56: #{tpu_custom_call.1} parent=1 // pred_region
      %370 = dma.done [#allocation10], 128
    $region57: #{tpu_custom_call.1} parent=1 // pred_fallthru
      _
    %371 = vsyncpa [#allocation9], 1
    %372 = vsyncpa [#allocation12], 1
    %373 = vsyncpa [#allocation10], 1

</llo_original>
